<compile_context>
chip_gen: v5e
topology: v5e:2x2
jax: 0.10.0
libtpu: 0.0.40
codegen_flags: <defaults>
</compile_context>

<pallas_src>
import functools
import math

import jax
import jax.numpy as jnp
from jax.experimental import pallas as pl
from jax.experimental.pallas import tpu as pltpu

LANE = 128   # TPU lane width
H1 = 30      # fc1 out features (logical)
H2 = 15      # fc2 out features (logical)


def mlp_kernel(x_ref, w1_ref, b1_ref, w2_ref, b2_ref, w3_ref, b3_ref, o_ref):
    # x tile: (TB, in_features) f32 streamed from HBM; cast to bf16 here (free on VPU,
    # kernel is memory-bound).  Weights: bf16, lane-padded, VMEM-resident.  Biases: f32.
    x = x_ref[...].astype(jnp.bfloat16)

    # fc1 + ReLU  (bf16 MXU operands, f32 accumulate; elementwise stays f32)
    h1 = jnp.dot(x, w1_ref[...], preferred_element_type=jnp.float32) + b1_ref[...]
    h1 = jnp.maximum(h1, 0.0)

    # fc2 + ReLU
    h2 = jnp.dot(h1.astype(jnp.bfloat16), w2_ref[...],
                 preferred_element_type=jnp.float32) + b2_ref[...]
    h2 = jnp.maximum(h2, 0.0)

    # fc3 + Sigmoid — output tile is a full 128-lane slab (lane-dense store)
    z = jnp.dot(h2.astype(jnp.bfloat16), w3_ref[...],
                preferred_element_type=jnp.float32) + b3_ref[...]
    o_ref[...] = jax.nn.sigmoid(z)


def _pad_cols(a, n):
    pad = n - a.shape[-1]
    return a if pad == 0 else jnp.pad(a, ((0, 0), (0, pad)))


def _pad_rows(a, n):
    pad = n - a.shape[0]
    return a if pad == 0 else jnp.pad(a, ((0, pad), (0, 0)))


@functools.partial(jax.jit, static_argnames=("block_b",))
def mlp_forward(x, params, block_b=1024):
    """x: (B, input_features) f32.  params: dict W1,b1,W2,b2,W3,b3 (W as (in, out))."""
    B, in_features = x.shape
    out_features = params["W3"].shape[1]

    # --- layout prep: weights/biases are tiny, pad+cast once per call (fused by XLA) ---
    w1 = _pad_cols(params["W1"], LANE).astype(jnp.bfloat16)                   # (in , 128)
    w2 = _pad_cols(_pad_rows(params["W2"], LANE), LANE).astype(jnp.bfloat16)  # (128, 128)
    w3 = _pad_cols(_pad_rows(params["W3"], LANE), LANE).astype(jnp.bfloat16)  # (128, 128)
    b1 = _pad_cols(params["b1"], LANE)                                        # (1, 128) f32
    b2 = _pad_cols(params["b2"], LANE)
    b3 = _pad_cols(params["b3"], LANE)

    # Batch tile: 1024-row pipelined tiles ((1024, 32) f32 in + (1024, 128) f32 out
    # ~= 640 KiB per step, trivially fits VMEM double-buffered); tiny batches take
    # the whole batch in one block.
    tb = block_b if B >= block_b else B
    grid = (pl.cdiv(B, tb),)

    resident = lambda shape: pl.BlockSpec(shape, lambda i: (0, 0))  # VMEM-resident across grid

    flops = 2 * B * (in_features * H1 + H1 * H2 + H2 * out_features)
    bytes_accessed = (B * in_features * 4            # x stream (f32)
                      + B * LANE * 4                 # lane-dense output (f32)
                      + (w1.size + w2.size + w3.size) * 2
                      + (b1.size + b2.size + b3.size) * 4)

    out_padded = pl.pallas_call(
        mlp_kernel,
        out_shape=jax.ShapeDtypeStruct((B, LANE), jnp.float32),
        grid=grid,
        in_specs=[
            pl.BlockSpec((tb, in_features), lambda i: (i, 0)),   # x: streamed per batch tile
            resident(w1.shape), resident(b1.shape),
            resident(w2.shape), resident(b2.shape),
            resident(w3.shape), resident(b3.shape),
        ],
        out_specs=pl.BlockSpec((tb, LANE), lambda i: (i, 0)),
        compiler_params=pltpu.CompilerParams(
            dimension_semantics=("parallel",),
        ),
        cost_estimate=pl.CostEstimate(
            flops=flops,
            transcendentals=B * LANE,
            bytes_accessed=bytes_accessed,
        ),
    )(x, w1, b1, w2, b2, w3, b3)

    return out_padded[:, :out_features]


def init_params(key, input_features, out_features):
    """torch.nn.Linear-style init (U[-1/sqrt(fan_in), +1/sqrt(fan_in)]).

    Weights stored as (in_features, out_features) (torch weight transposed);
    biases stored as (1, out_features) so they broadcast over the batch.
    """
    sizes = [(input_features, H1), (H1, H2), (H2, out_features)]
    params = {}
    for i, (fan_in, fan_out) in enumerate(sizes, start=1):
        key, kw, kb = jax.random.split(key, 3)
        bound = 1.0 / math.sqrt(fan_in)
        params[f"W{i}"] = jax.random.uniform(
            kw, (fan_in, fan_out), jnp.float32, minval=-bound, maxval=bound)
        params[f"b{i}"] = jax.random.uniform(
            kb, (1, fan_out), jnp.float32, minval=-bound, maxval=bound)
    return params


def mlp_reference(x, params):
    """Pure-JAX reference mirroring the kernel's bf16-operand / f32-accumulate scheme."""
    bf = lambda a: a.astype(jnp.bfloat16).astype(jnp.float32)
    h1 = jnp.maximum(bf(x) @ bf(params["W1"]) + params["b1"], 0.0)
    h2 = jnp.maximum(bf(h1) @ bf(params["W2"]) + params["b2"], 0.0)
    return jax.nn.sigmoid(bf(h2) @ bf(params["W3"]) + params["b3"])


if __name__ == "__main__":
    key = jax.random.PRNGKey(0)
    key, kx, kp, kx2 = jax.random.split(key, 4)

    input_features = 32
    out_features = 4
    params = init_params(kp, input_features, out_features)

    # Small demo batch (single-tile path).
    batch = 8
    x = jax.random.normal(kx, (batch, input_features), jnp.float32)
    out = jax.block_until_ready(mlp_forward(x, params))
    ref = mlp_reference(x, params)
    assert out.shape == (batch, out_features)
    assert jnp.allclose(out, ref, atol=1e-3, rtol=1e-3), "mismatch vs reference (small batch)"

    # Larger, ragged batch to exercise the pipelined multi-tile grid path
    # (grid of 2, final tile partially out of bounds -> masked writeback).
    batch2 = 1100
    x2 = jax.random.normal(kx2, (batch2, input_features), jnp.float32)
    out2 = jax.block_until_ready(mlp_forward(x2, params))
    ref2 = mlp_reference(x2, params)
    assert out2.shape == (batch2, out_features)
    assert jnp.allclose(out2, ref2, atol=1e-3, rtol=1e-3), "mismatch vs reference (tiled batch)"

    print("KERNEL_OK")
</pallas_src>

<mosaic_0001>
module attributes {stable_mosaic.version = 11 : i64} {
  func.func @mlp_kernel(%arg0: i32, %arg1: memref<8x32xf32, #tpu.memory_space<vmem>>, %arg2: memref<32x128xbf16, #tpu.memory_space<vmem>>, %arg3: memref<1x128xf32, #tpu.memory_space<vmem>>, %arg4: memref<128x128xbf16, #tpu.memory_space<vmem>>, %arg5: memref<1x128xf32, #tpu.memory_space<vmem>>, %arg6: memref<128x128xbf16, #tpu.memory_space<vmem>>, %arg7: memref<1x128xf32, #tpu.memory_space<vmem>>, %arg8: memref<8x128xf32, #tpu.memory_space<vmem>>) attributes {dimension_semantics = [#tpu.dimension_semantics<parallel>], iteration_bounds = array<i64: 1>, scalar_prefetch = 0 : i64, scratch_operands = 0 : i64, tpu.core_type = #tpu.core_type<tc>, window_params = [{transform_indices = @transform_0, window_bounds = array<i64: 8, 32>}, {pipeline_mode = #tpu.pipeline_mode<synchronous>, transform_indices = @transform_1, window_bounds = array<i64: 32, 128>}, {pipeline_mode = #tpu.pipeline_mode<synchronous>, transform_indices = @transform_2, window_bounds = array<i64: 1, 128>}, {pipeline_mode = #tpu.pipeline_mode<synchronous>, transform_indices = @transform_3, window_bounds = array<i64: 128, 128>}, {pipeline_mode = #tpu.pipeline_mode<synchronous>, transform_indices = @transform_4, window_bounds = array<i64: 1, 128>}, {pipeline_mode = #tpu.pipeline_mode<synchronous>, transform_indices = @transform_5, window_bounds = array<i64: 128, 128>}, {pipeline_mode = #tpu.pipeline_mode<synchronous>, transform_indices = @transform_6, window_bounds = array<i64: 1, 128>}, {transform_indices = @transform_7, window_bounds = array<i64: 8, 128>}]} {
    %c0 = arith.constant 0 : index
    %c0_0 = arith.constant 0 : index
    %0 = vector.load %arg1[%c0, %c0_0] : memref<8x32xf32, #tpu.memory_space<vmem>>, vector<8x32xf32>
    %1 = arith.truncf %0 : vector<8x32xf32> to vector<8x32xbf16>
    %c0_1 = arith.constant 0 : index
    %c0_2 = arith.constant 0 : index
    %2 = vector.load %arg2[%c0_1, %c0_2] : memref<32x128xbf16, #tpu.memory_space<vmem>>, vector<32x128xbf16>
    %cst = arith.constant dense<0.000000e+00> : vector<8x128xf32>
    %3 = tpu.matmul %1, %2, %cst {dimension_numbers = #tpu.dot_dimension_numbers<[1], [0], [0], [1], [0, 0, 1, 1], [], []>} : vector<8x32xbf16>, vector<32x128xbf16>, vector<8x128xf32> -> vector<8x128xf32>
    %c0_3 = arith.constant 0 : index
    %c0_4 = arith.constant 0 : index
    %4 = vector.load %arg3[%c0_3, %c0_4] : memref<1x128xf32, #tpu.memory_space<vmem>>, vector<1x128xf32>
    %5 = vector.broadcast %4 : vector<1x128xf32> to vector<8x128xf32>
    %6 = arith.addf %3, %5 : vector<8x128xf32>
    %cst_5 = arith.constant 0.000000e+00 : f32
    %7 = vector.broadcast %cst_5 : f32 to vector<8x128xf32>
    %8 = arith.maximumf %6, %7 : vector<8x128xf32>
    %9 = arith.truncf %8 : vector<8x128xf32> to vector<8x128xbf16>
    %c0_6 = arith.constant 0 : index
    %c0_7 = arith.constant 0 : index
    %10 = vector.load %arg4[%c0_6, %c0_7] : memref<128x128xbf16, #tpu.memory_space<vmem>>, vector<128x128xbf16>
    %cst_8 = arith.constant dense<0.000000e+00> : vector<8x128xf32>
    %11 = tpu.matmul %9, %10, %cst_8 {dimension_numbers = #tpu.dot_dimension_numbers<[1], [0], [0], [1], [0, 0, 1, 1], [], []>} : vector<8x128xbf16>, vector<128x128xbf16>, vector<8x128xf32> -> vector<8x128xf32>
    %c0_9 = arith.constant 0 : index
    %c0_10 = arith.constant 0 : index
    %12 = vector.load %arg5[%c0_9, %c0_10] : memref<1x128xf32, #tpu.memory_space<vmem>>, vector<1x128xf32>
    %13 = vector.broadcast %12 : vector<1x128xf32> to vector<8x128xf32>
    %14 = arith.addf %11, %13 : vector<8x128xf32>
    %cst_11 = arith.constant 0.000000e+00 : f32
    %15 = vector.broadcast %cst_11 : f32 to vector<8x128xf32>
    %16 = arith.maximumf %14, %15 : vector<8x128xf32>
    %17 = arith.truncf %16 : vector<8x128xf32> to vector<8x128xbf16>
    %c0_12 = arith.constant 0 : index
    %c0_13 = arith.constant 0 : index
    %18 = vector.load %arg6[%c0_12, %c0_13] : memref<128x128xbf16, #tpu.memory_space<vmem>>, vector<128x128xbf16>
    %cst_14 = arith.constant dense<0.000000e+00> : vector<8x128xf32>
    %19 = tpu.matmul %17, %18, %cst_14 {dimension_numbers = #tpu.dot_dimension_numbers<[1], [0], [0], [1], [0, 0, 1, 1], [], []>} : vector<8x128xbf16>, vector<128x128xbf16>, vector<8x128xf32> -> vector<8x128xf32>
    %c0_15 = arith.constant 0 : index
    %c0_16 = arith.constant 0 : index
    %20 = vector.load %arg7[%c0_15, %c0_16] : memref<1x128xf32, #tpu.memory_space<vmem>>, vector<1x128xf32>
    %21 = vector.broadcast %20 : vector<1x128xf32> to vector<8x128xf32>
    %22 = arith.addf %19, %21 : vector<8x128xf32>
    %23 = arith.negf %22 : vector<8x128xf32>
    %24 = math.exp %23 : vector<8x128xf32>
    %cst_17 = arith.constant 1.000000e+00 : f32
    %25 = vector.broadcast %cst_17 : f32 to vector<8x128xf32>
    %26 = arith.addf %25, %24 : vector<8x128xf32>
    %27 = arith.divf %25, %26 : vector<8x128xf32>
    %c0_18 = arith.constant 0 : index
    %c0_19 = arith.constant 0 : index
    %28 = vector.load %arg8[%c0_18, %c0_19] : memref<8x128xf32, #tpu.memory_space<vmem>>, vector<8x128xf32>
    tpu.vector_store %arg8[%c0_18, %c0_19], %27 {strides = array<i32>} : memref<8x128xf32, #tpu.memory_space<vmem>>, vector<8x128xf32>,
    return
  }
  func.func @transform_0(%arg0: i32) -> (i32, i32) {
    %c0_i32 = arith.constant 0 : i32
    %c0_i32_0 = arith.constant 0 : i32
    return %arg0, %c0_i32 : i32, i32
  }
  func.func @transform_1(%arg0: i32) -> (i32, i32) {
    %c0_i32 = arith.constant 0 : i32
    %c0_i32_0 = arith.constant 0 : i32
    %c0_i32_1 = arith.constant 0 : i32
    return %c0_i32, %c0_i32_0 : i32, i32
  }
  func.func @transform_2(%arg0: i32) -> (i32, i32) {
    %c0_i32 = arith.constant 0 : i32
    %c0_i32_0 = arith.constant 0 : i32
    %c0_i32_1 = arith.constant 0 : i32
    return %c0_i32, %c0_i32_0 : i32, i32
  }
  func.func @transform_3(%arg0: i32) -> (i32, i32) {
    %c0_i32 = arith.constant 0 : i32
    %c0_i32_0 = arith.constant 0 : i32
    %c0_i32_1 = arith.constant 0 : i32
    return %c0_i32, %c0_i32_0 : i32, i32
  }
  func.func @transform_4(%arg0: i32) -> (i32, i32) {
    %c0_i32 = arith.constant 0 : i32
    %c0_i32_0 = arith.constant 0 : i32
    %c0_i32_1 = arith.constant 0 : i32
    return %c0_i32, %c0_i32_0 : i32, i32
  }
  func.func @transform_5(%arg0: i32) -> (i32, i32) {
    %c0_i32 = arith.constant 0 : i32
    %c0_i32_0 = arith.constant 0 : i32
    %c0_i32_1 = arith.constant 0 : i32
    return %c0_i32, %c0_i32_0 : i32, i32
  }
  func.func @transform_6(%arg0: i32) -> (i32, i32) {
    %c0_i32 = arith.constant 0 : i32
    %c0_i32_0 = arith.constant 0 : i32
    %c0_i32_1 = arith.constant 0 : i32
    return %c0_i32, %c0_i32_0 : i32, i32
  }
  func.func @transform_7(%arg0: i32) -> (i32, i32) {
    %c0_i32 = arith.constant 0 : i32
    %c0_i32_0 = arith.constant 0 : i32
    return %arg0, %c0_i32 : i32, i32
  }
}

</mosaic_0001>

<llo_original>
// kernel: mlp_forward.1
$region0: #{mlp_forward.1}
  #allocation0 [shape = 'u32[]', space=smem, size = 0x4, offset = 0x4, fixed_abs, tag = 'smem constant byte address 0x4 - core index']
  #allocation1 [shape = 'u32[72,128]{1,0:T(1,128)}', space=vmem, size = 0x9000, scoped, tag = 'internal scratch']
  %s0 = inlined_call_operand.vmem [shape: f32[8,32], index: 0, kind: input, shape index: {}]
  %s1 = inlined_call_operand.vmem [shape: bf16[32,128], index: 1, kind: input, shape index: {}]
  %s2 = inlined_call_operand.vmem [shape: f32[1,128], index: 2, kind: input, shape index: {}]
  %s3 = inlined_call_operand.vmem [shape: bf16[128,128], index: 3, kind: input, shape index: {}]
  %s4 = inlined_call_operand.vmem [shape: f32[1,128], index: 4, kind: input, shape index: {}]
  %s5 = inlined_call_operand.vmem [shape: bf16[128,128], index: 5, kind: input, shape index: {}]
  %s6 = inlined_call_operand.vmem [shape: f32[1,128], index: 6, kind: input, shape index: {}]
  %s7 = inlined_call_operand.vmem [shape: f32[8,128], index: 7, kind: output, shape index: {}]
  %s8 = sld [smem:[#allocation0]]
  $region38: #{mlp_forward.1} parent=0
    _
  %s10 = ssub.s32 1, %s8
  %s11 = scalar_select 0, %s10, %s8
  // Predicated region
  $region2: #{mlp_forward.1} parent=0 // pred_check
    _
  $region3: #{mlp_forward.1} parent=0 // pred_check_branch
    %13 = sbr.rel (0) target = $region5
  $region4: #{mlp_forward.1} parent=0 // pred_region
    _
  $region5: #{mlp_forward.1} parent=0 // pred_fallthru
    _
  // Predicated region
  $region6: #{mlp_forward.1} parent=0 // pred_check
    _
  $region7: #{mlp_forward.1} parent=0 // pred_check_branch
    %15 = sbr.rel (0) target = $region9
  $region8: #{mlp_forward.1} parent=0 // pred_region
    _
  $region9: #{mlp_forward.1} parent=0 // pred_fallthru
    _
  // Predicated region
  $region10: #{mlp_forward.1} parent=0 // pred_check
    _
  $region11: #{mlp_forward.1} parent=0 // pred_check_branch
    %17 = sbr.rel (0) target = $region13
  $region12: #{mlp_forward.1} parent=0 // pred_region
    _
  $region13: #{mlp_forward.1} parent=0 // pred_fallthru
    _
  // Predicated region
  $region14: #{mlp_forward.1} parent=0 // pred_check
    _
  $region15: #{mlp_forward.1} parent=0 // pred_check_branch
    %19 = sbr.rel (0) target = $region17
  $region16: #{mlp_forward.1} parent=0 // pred_region
    _
  $region17: #{mlp_forward.1} parent=0 // pred_fallthru
    _
  // Predicated region
  $region18: #{mlp_forward.1} parent=0 // pred_check
    _
  $region19: #{mlp_forward.1} parent=0 // pred_check_branch
    %21 = sbr.rel (0) target = $region21
  $region20: #{mlp_forward.1} parent=0 // pred_region
    _
  $region21: #{mlp_forward.1} parent=0 // pred_fallthru
    _
  // Predicated region
  $region22: #{mlp_forward.1} parent=0 // pred_check
    _
  $region23: #{mlp_forward.1} parent=0 // pred_check_branch
    %23 = sbr.rel (0) target = $region25
  $region24: #{mlp_forward.1} parent=0 // pred_region
    _
  $region25: #{mlp_forward.1} parent=0 // pred_fallthru
    _
  // Predicated region
  $region26: #{mlp_forward.1} parent=0 // pred_check
    _
  $region27: #{mlp_forward.1} parent=0 // pred_check_branch
    %25 = sbr.rel (0) target = $region29
  $region28: #{mlp_forward.1} parent=0 // pred_region
    _
  $region29: #{mlp_forward.1} parent=0 // pred_fallthru
    _
  %v27 = vld [vmem:[%s0] sm:$0xff]
  %v28 = vpack.c.bf16 %v27, %v27
  %v29 = vld [vmem:[%s1] sm:$0xf]
  %v30 = vld [vmem:[%s1 + $0x4] sm:$0xf]
  %v31 = vld [vmem:[%s1 + $0x8] sm:$0xf]
  %v32 = vld [vmem:[%s1 + $0xc] sm:$0xf]
  %v33 = vld [vmem:[%s2] sm:$0x1]
  %v35 = vperm.slane %v33, 0
  %v41 = vunpack.c.l.b16 %v29
  %v42 = vunpack.c.l.b16 %v30
  %v43 = vunpack.c.l.b16 %v31
  %v44 = vunpack.c.l.b16 %v32
  %v45 = vpack.c.b16 %v42, %v41
  %v46 = vpack.c.b16 %v44, %v43
  %vm49 = vcmask 261120
  %v51 = vsel %vm49, %v28, 0
  %53 = vmatpush.bf16.msra.mxu0 0
  %54 = vmatpush.bf16.msra.mxu0 0
  %55 = vmatpush.bf16.msra.mxu0 0
  %56 = vmatpush.bf16.msra.mxu0 0
  %57 = vmatpush.bf16.msra.mxu0 0
  %58 = vmatpush.bf16.msra.mxu0 0
  %59 = vmatpush.bf16.msra.mxu0 %v46
  %60 = vmatpush.bf16.msra.mxu0 %v45
  %61 = vmatmul.bf16.gmra.mxu0 %v51
  %v62 = vpop.f32.mrf.mxu0
  %v63 = vadd.f32 %v35, %v62
  %v64 = vpop.f32.mrf.mxu0
  %65 = vdwg.mxu0
  %v66 = vmax.f32 %v63, 0.0
  %v67 = vpack.c.bf16 %v66, %v66
  %v68 = vld [vmem:[%s3] sm:$0xf]
  %v69 = vld [vmem:[%s3 + $0x4] sm:$0xf]
  %v70 = vld [vmem:[%s3 + $0x8] sm:$0xf]
  %v71 = vld [vmem:[%s3 + $0xc] sm:$0xf]
  %v72 = vld [vmem:[%s3 + $0x10] sm:$0xf]
  %v73 = vld [vmem:[%s3 + $0x14] sm:$0xf]
  %v74 = vld [vmem:[%s3 + $0x18] sm:$0xf]
  %v75 = vld [vmem:[%s3 + $0x1c] sm:$0xf]
  %v76 = vld [vmem:[%s3 + $0x20] sm:$0xf]
  %v77 = vld [vmem:[%s3 + $0x24] sm:$0xf]
  %v78 = vld [vmem:[%s3 + $0x28] sm:$0xf]
  %v79 = vld [vmem:[%s3 + $0x2c] sm:$0xf]
  %v80 = vld [vmem:[%s3 + $0x30] sm:$0xf]
  %v81 = vld [vmem:[%s3 + $0x34] sm:$0xf]
  %v82 = vld [vmem:[%s3 + $0x38] sm:$0xf]
  %v83 = vld [vmem:[%s3 + $0x3c] sm:$0xf]
  %v84 = vld [vmem:[%s4] sm:$0x1]
  %v86 = vperm.slane %v84, 0
  %v104 = vunpack.c.l.b16 %v68
  %v105 = vunpack.c.l.b16 %v69
  %v106 = vunpack.c.l.b16 %v70
  %v107 = vunpack.c.l.b16 %v71
  %v108 = vunpack.c.l.b16 %v72
  %v109 = vunpack.c.l.b16 %v73
  %v110 = vunpack.c.l.b16 %v74
  %v111 = vunpack.c.l.b16 %v75
  %v112 = vunpack.c.l.b16 %v76
  %v113 = vunpack.c.l.b16 %v77
  %v114 = vunpack.c.l.b16 %v78
  %v115 = vunpack.c.l.b16 %v79
  %v116 = vunpack.c.l.b16 %v80
  %v117 = vunpack.c.l.b16 %v81
  %v118 = vunpack.c.l.b16 %v82
  %v119 = vunpack.c.l.b16 %v83
  %v120 = vpack.c.b16 %v105, %v104
  %v121 = vpack.c.b16 %v107, %v106
  %v122 = vpack.c.b16 %v109, %v108
  %v123 = vpack.c.b16 %v111, %v110
  %v124 = vpack.c.b16 %v113, %v112
  %v125 = vpack.c.b16 %v115, %v114
  %v126 = vpack.c.b16 %v117, %v116
  %v127 = vpack.c.b16 %v119, %v118
  %136 = vmatpush.bf16.msra.mxu0 %v127
  %137 = vmatpush.bf16.msra.mxu0 %v126
  %138 = vmatpush.bf16.msra.mxu0 %v125
  %139 = vmatpush.bf16.msra.mxu0 %v124
  %140 = vmatpush.bf16.msra.mxu0 %v123
  %141 = vmatpush.bf16.msra.mxu0 %v122
  %142 = vmatpush.bf16.msra.mxu0 %v121
  %143 = vmatpush.bf16.msra.mxu0 %v120
  %144 = vmatmul.bf16.gmra.mxu0 %v67
  %v145 = vpop.f32.mrf.mxu0
  %v146 = vadd.f32 %v86, %v145
  %v147 = vpop.f32.mrf.mxu0
  %148 = vdwg.mxu0
  %v149 = vmax.f32 %v146, 0.0
  %v150 = vpack.c.bf16 %v149, %v149
  %v151 = vld [vmem:[%s5] sm:$0xf]
  %v152 = vld [vmem:[%s5 + $0x4] sm:$0xf]
  %v153 = vld [vmem:[%s5 + $0x8] sm:$0xf]
  %v154 = vld [vmem:[%s5 + $0xc] sm:$0xf]
  %v155 = vld [vmem:[%s5 + $0x10] sm:$0xf]
  %v156 = vld [vmem:[%s5 + $0x14] sm:$0xf]
  %v157 = vld [vmem:[%s5 + $0x18] sm:$0xf]
  %v158 = vld [vmem:[%s5 + $0x1c] sm:$0xf]
  %v159 = vld [vmem:[%s5 + $0x20] sm:$0xf]
  %v160 = vld [vmem:[%s5 + $0x24] sm:$0xf]
  %v161 = vld [vmem:[%s5 + $0x28] sm:$0xf]
  %v162 = vld [vmem:[%s5 + $0x2c] sm:$0xf]
  %v163 = vld [vmem:[%s5 + $0x30] sm:$0xf]
  %v164 = vld [vmem:[%s5 + $0x34] sm:$0xf]
  %v165 = vld [vmem:[%s5 + $0x38] sm:$0xf]
  %v166 = vld [vmem:[%s5 + $0x3c] sm:$0xf]
  %v167 = vld [vmem:[%s6] sm:$0x1]
  %v169 = vperm.slane %v167, 0
  %v187 = vunpack.c.l.b16 %v151
  %v188 = vunpack.c.l.b16 %v152
  %v189 = vunpack.c.l.b16 %v153
  %v190 = vunpack.c.l.b16 %v154
  %v191 = vunpack.c.l.b16 %v155
  %v192 = vunpack.c.l.b16 %v156
  %v193 = vunpack.c.l.b16 %v157
  %v194 = vunpack.c.l.b16 %v158
  %v195 = vunpack.c.l.b16 %v159
  %v196 = vunpack.c.l.b16 %v160
  %v197 = vunpack.c.l.b16 %v161
  %v198 = vunpack.c.l.b16 %v162
  %v199 = vunpack.c.l.b16 %v163
  %v200 = vunpack.c.l.b16 %v164
  %v201 = vunpack.c.l.b16 %v165
  %v202 = vunpack.c.l.b16 %v166
  %v203 = vpack.c.b16 %v188, %v187
  %v204 = vpack.c.b16 %v190, %v189
  %v205 = vpack.c.b16 %v192, %v191
  %v206 = vpack.c.b16 %v194, %v193
  %v207 = vpack.c.b16 %v196, %v195
  %v208 = vpack.c.b16 %v198, %v197
  %v209 = vpack.c.b16 %v200, %v199
  %v210 = vpack.c.b16 %v202, %v201
  %219 = vmatpush.bf16.msra.mxu0 %v210
  %220 = vmatpush.bf16.msra.mxu0 %v209
  %221 = vmatpush.bf16.msra.mxu0 %v208
  %222 = vmatpush.bf16.msra.mxu0 %v207
  %223 = vmatpush.bf16.msra.mxu0 %v206
  %224 = vmatpush.bf16.msra.mxu0 %v205
  %225 = vmatpush.bf16.msra.mxu0 %v204
  %226 = vmatpush.bf16.msra.mxu0 %v203
  %227 = vmatmul.bf16.gmra.mxu0 %v150
  %v228 = vpop.f32.mrf.mxu0
  %v229 = vadd.f32 %v169, %v228
  %v230 = vpop.f32.mrf.mxu0
  %231 = vdwg.mxu0
  %v232 = vxor.u32 %v229, 2147483648
  %v233 = vmul.f32 %v232, 1.442695
  %v234 = vpow.pop %v233
  %v235 = vadd.f32 %v234, 1.0
  %v236 = vrcp.pop %v235
  %v237 = vmul.f32 %v235, %v236
  %v238 = vsub.f32 1.0, %v237
  %v239 = vmul.f32 %v236, %v238
  %v240 = vadd.f32 %v236, %v239
  %vm241 = vweird.f32 %v235
  %vm242 = vweird.f32 %v236
  %vm243 = vmor %vm241, %vm242
  %v244 = vsel %vm243, %v236, %v240
  %v245 = vand.u32 2147483647, %v235
  %vm246 = vcmp.eq.f32.partialorder %v245, 8.507059e+37
  %v247 = vand.u32 %v235, 2147483648
  %v248 = vor.u32 1.1754944e-38, %v247
  %v249 = vsel %vm246, %v248, %v244
  %v250 = vmul.f32 1.0, %v249
  %251 = vst [vmem:[%s7] sm:$0xff] %v250
  // Predicated region
  $region30: #{mlp_forward.1} parent=0 // pred_check
    _
  $region31: #{mlp_forward.1} parent=0 // pred_check_branch
    %253 = sbr.rel (0) target = $region33
  $region32: #{mlp_forward.1} parent=0 // pred_region
    _
  $region33: #{mlp_forward.1} parent=0 // pred_fallthru
    _
  // Predicated region
  $region34: #{mlp_forward.1} parent=0 // pred_check
    _
  $region35: #{mlp_forward.1} parent=0 // pred_check_branch
    %255 = sbr.rel (0) target = $region37
  $region36: #{mlp_forward.1} parent=0 // pred_region
    _
  $region37: #{mlp_forward.1} parent=0 // pred_fallthru
    _

</llo_original>
